<compile_context>
chip_gen: v6e
topology: v6e:2x2x1
jax: 0.10.0
libtpu: 0.0.40
codegen_flags: <defaults>
</compile_context>

<pallas_src>
import jax
import jax.numpy as jnp
from jax.experimental import pallas as pl
from jax.experimental.pallas import tpu as pltpu

_LANES = 128  # lane-dense last dim


def _sublanes_for(dtype) -> int:
    # Min second-to-last tile dim: 8 (32-bit), 16 (16-bit), 32 (8-bit).
    itemsize = jnp.dtype(dtype).itemsize
    return max(8, 32 // max(itemsize, 1))


def _target_config():
    """(target_rows_per_block, vmem_limit_bytes) gated per TPU generation."""
    try:
        kind = jax.devices()[0].device_kind.lower()
    except Exception:  # pragma: no cover - defensive
        kind = ""
    if ("v6" in kind) or ("v7" in kind) or ("7x" in kind):
        # 8192 x 128 x 4B = 4 MiB f32 block; ~16 MiB with in+out double
        # buffering, well inside an explicit 32 MiB scoped-VMEM limit.
        return 8192, 32 * 1024 * 1024
    # v5e (16 MiB scoped default) and anything unknown: keep 2 MiB blocks.
    return 4096, None


def _choose_tile_rows(rows: int, target_rows: int, sublanes: int) -> int:
    """Pick a block height giving ~8 pipelined grid steps, <= target_rows."""
    tile = max(sublanes, min(target_rows, rows // 8))
    tile = ((tile + sublanes - 1) // sublanes) * sublanes
    if tile >= rows:
        return rows  # single block == full array dims (always legal)
    return tile


def _atan_kernel(x_ref, o_ref):
    # Compute in f32 (v5e VPU/EUP have no bf16 path anyway); cast back on store.
    x = x_ref[...].astype(jnp.float32)
    # Clamp keeps the reduction finite even for |x| = inf / padded garbage;
    # atan(1e18) == pi/2 in f32 anyway.
    ax = jnp.minimum(jnp.abs(x), 1e18)

    T3P8 = 2.414213562373095     # tan(3*pi/8)
    TP8 = 0.4142135623730951     # tan(pi/8)
    PIO4 = 0.7853981633974483    # pi/4

    big = ax > T3P8              # reduce via atan(x) = pi/2 - atan(1/x)
    mid = ax > TP8               # reduce via atan(x) = pi/4 + atan((x-1)/(x+1))

    # Unified reduction: xr = num/den, offset added back afterwards.
    #   big  : num = -1   den = ax    offset = pi/2
    #   mid  : num = ax-1 den = ax+1  offset = pi/4
    #   small: num = ax   den = 1     offset = 0
    s = jnp.where(big, 0.0, 1.0)
    c = jnp.where(mid, 1.0, 0.0)
    num = ax * s - c
    den = c * ax + s                       # always >= 1
    offset = PIO4 * (c - s + 1.0)

    # Divide via EUP approx reciprocal (frees the VALU) + one Newton step to
    # recover ~f32 accuracy.
    r = pl.reciprocal(den, approx=True)
    r = r * (2.0 - den * r)
    xr = num * r

    # Cephes atanf minimax polynomial on the reduced argument (|xr| <= tan(pi/8)).
    z = xr * xr
    p = ((8.05374449538e-2 * z - 1.38776856032e-1) * z
         + 1.99777106478e-1) * z - 3.33329491539e-1
    y = offset + (p * z * xr + xr)

    # Restore the sign of x by XOR-ing its sign bit in (also preserves -0.0).
    sign = pltpu.bitcast(x, jnp.uint32) & jnp.uint32(0x80000000)
    y = pltpu.bitcast(pltpu.bitcast(y, jnp.uint32) ^ sign, jnp.float32)

    o_ref[...] = y.astype(o_ref.dtype)


def _pallas_atan_2d(x2d: jax.Array, tile_rows: int, vmem_limit) -> jax.Array:
    rows, _ = x2d.shape
    grid = (pl.cdiv(rows, tile_rows),)
    return pl.pallas_call(
        _atan_kernel,
        out_shape=jax.ShapeDtypeStruct(x2d.shape, x2d.dtype),
        grid_spec=pltpu.PrefetchScalarGridSpec(
            num_scalar_prefetch=0,
            grid=grid,
            in_specs=[pl.BlockSpec((tile_rows, _LANES), lambda i: (i, 0))],
            out_specs=pl.BlockSpec((tile_rows, _LANES), lambda i: (i, 0)),
        ),
        compiler_params=pltpu.CompilerParams(
            # "parallel" shards the 1-D grid across TensorCores on megacore
            # parts (v7x); harmless elsewhere.
            dimension_semantics=("parallel",),
            vmem_limit_bytes=vmem_limit,
        ),
    )(x2d)


def arctan(x: jax.Array, *, min_pallas_elems: int = 65536) -> jax.Array:
    """Elementwise atan(x) (forward of the `Arctanh` module) via Pallas on TPU."""
    orig_shape = x.shape
    n = x.size
    if n == 0:
        return x

    # Small-input bypass: pallas_call / reshape overhead dominates below ~64K
    # elements; XLA's fused elementwise path wins outright there.
    if n < min_pallas_elems:
        return jnp.arctan(x)

    dtype = x.dtype
    target_rows, vmem_limit = _target_config()
    sublanes = _sublanes_for(dtype)

    x_flat = x.reshape(-1)
    m = (n // _LANES) * _LANES  # lane-aligned prefix length
    if m == 0:
        return jnp.arctan(x)

    head = x_flat if m == n else x_flat[:m]
    rows = m // _LANES
    tile_rows = _choose_tile_rows(rows, target_rows, sublanes)

    out_head = _pallas_atan_2d(head.reshape(rows, _LANES), tile_rows,
                               vmem_limit).reshape(-1)

    if m == n:
        return out_head.reshape(orig_shape)

    # Ragged tail (< 128 elements): compute directly and stitch — avoids the
    # whole-array pad + slice round trips of the previous version.
    tail_out = jnp.arctan(x_flat[m:])
    return jnp.concatenate([out_head, tail_out]).reshape(orig_shape)


if __name__ == "__main__":
    key = jax.random.PRNGKey(0)
    k1, k2, k3 = jax.random.split(key, 3)

    # Small conv-net activation (NCHW), forced through the Pallas kernel path.
    x_small = jax.random.normal(key, (2, 4, 16, 16), dtype=jnp.float32) * 3.0
    y_small = arctan(x_small, min_pallas_elems=0)
    jax.block_until_ready(y_small)
    assert jnp.allclose(y_small, jnp.arctan(x_small), atol=1e-5, rtol=1e-5), \
        "mismatch vs jnp.arctan (small forced)"

    # Lane-aligned input above the bypass threshold: multi-step pipelined grid.
    x_big = jax.random.normal(k1, (4, 16, 64, 64), dtype=jnp.float32) * 10.0
    y_big = arctan(x_big)
    jax.block_until_ready(y_big)
    assert jnp.allclose(y_big, jnp.arctan(x_big), atol=1e-5, rtol=1e-5), \
        "mismatch vs jnp.arctan (large)"

    # Ragged input above the threshold: kernel on the aligned head, tiny tail
    # computed directly and stitched back.
    x_rag = jax.random.normal(k2, (257, 515), dtype=jnp.float32) * 5.0
    y_rag = arctan(x_rag)
    jax.block_until_ready(y_rag)
    assert jnp.allclose(y_rag, jnp.arctan(x_rag), atol=1e-5, rtol=1e-5), \
        "mismatch vs jnp.arctan (ragged)"

    # Tiny ragged input exercises the small-input bypass.
    x_tiny = jax.random.normal(k3, (3, 5, 7), dtype=jnp.float32) * 10.0
    y_tiny = arctan(x_tiny)
    jax.block_until_ready(y_tiny)
    assert jnp.allclose(y_tiny, jnp.arctan(x_tiny), atol=1e-5, rtol=1e-5), \
        "mismatch vs jnp.arctan (tiny)"

    print("KERNEL_OK")
</pallas_src>

<mosaic_0001>
module attributes {stable_mosaic.version = 11 : i64} {
  func.func @_atan_kernel(%arg0: i32, %arg1: memref<8x128xf32, #tpu.memory_space<vmem>>, %arg2: memref<8x128xf32, #tpu.memory_space<vmem>>) attributes {dimension_semantics = [#tpu.dimension_semantics<parallel>], iteration_bounds = array<i64: 2>, scalar_prefetch = 0 : i64, scratch_operands = 0 : i64, tpu.core_type = #tpu.core_type<tc>, window_params = [{transform_indices = @transform_0, window_bounds = array<i64: 8, 128>}, {transform_indices = @transform_1, window_bounds = array<i64: 8, 128>}]} {
    %c0 = arith.constant 0 : index
    %c0_0 = arith.constant 0 : index
    %0 = vector.load %arg1[%c0, %c0_0] : memref<8x128xf32, #tpu.memory_space<vmem>>, vector<8x128xf32>
    %1 = math.absf %0 : vector<8x128xf32>
    %cst = arith.constant 9.99999984E+17 : f32
    %2 = vector.broadcast %cst : f32 to vector<8x128xf32>
    %3 = arith.minimumf %1, %2 : vector<8x128xf32>
    %cst_1 = arith.constant 2.41421366 : f32
    %4 = vector.broadcast %cst_1 : f32 to vector<8x128xf32>
    %5 = arith.cmpf ogt, %3, %4 : vector<8x128xf32>
    %cst_2 = arith.constant 0.414213568 : f32
    %6 = vector.broadcast %cst_2 : f32 to vector<8x128xf32>
    %7 = arith.cmpf ogt, %3, %6 : vector<8x128xf32>
    %cst_3 = arith.constant 0.000000e+00 : f32
    %cst_4 = arith.constant 1.000000e+00 : f32
    %8 = vector.broadcast %cst_3 : f32 to vector<8x128xf32>
    %9 = vector.broadcast %cst_4 : f32 to vector<8x128xf32>
    %10 = arith.select %5, %8, %9 : vector<8x128xi1>, vector<8x128xf32>
    %cst_5 = arith.constant 1.000000e+00 : f32
    %cst_6 = arith.constant 0.000000e+00 : f32
    %11 = vector.broadcast %cst_5 : f32 to vector<8x128xf32>
    %12 = vector.broadcast %cst_6 : f32 to vector<8x128xf32>
    %13 = arith.select %7, %11, %12 : vector<8x128xi1>, vector<8x128xf32>
    %14 = arith.mulf %3, %10 : vector<8x128xf32>
    %15 = arith.subf %14, %13 : vector<8x128xf32>
    %16 = arith.mulf %13, %3 : vector<8x128xf32>
    %17 = arith.addf %16, %10 : vector<8x128xf32>
    %18 = arith.subf %13, %10 : vector<8x128xf32>
    %cst_7 = arith.constant 1.000000e+00 : f32
    %19 = vector.broadcast %cst_7 : f32 to vector<8x128xf32>
    %20 = arith.addf %18, %19 : vector<8x128xf32>
    %cst_8 = arith.constant 0.785398185 : f32
    %21 = vector.broadcast %cst_8 : f32 to vector<8x128xf32>
    %22 = arith.mulf %21, %20 : vector<8x128xf32>
    %23 = tpu.reciprocal %17 {approx = true} : vector<8x128xf32> -> vector<8x128xf32>
    %24 = arith.mulf %17, %23 : vector<8x128xf32>
    %cst_9 = arith.constant 2.000000e+00 : f32
    %25 = vector.broadcast %cst_9 : f32 to vector<8x128xf32>
    %26 = arith.subf %25, %24 : vector<8x128xf32>
    %27 = arith.mulf %23, %26 : vector<8x128xf32>
    %28 = arith.mulf %15, %27 : vector<8x128xf32>
    %29 = arith.mulf %28, %28 : vector<8x128xf32>
    %cst_10 = arith.constant 0.0805374458 : f32
    %30 = vector.broadcast %cst_10 : f32 to vector<8x128xf32>
    %31 = arith.mulf %30, %29 : vector<8x128xf32>
    %cst_11 = arith.constant 0.138776854 : f32
    %32 = vector.broadcast %cst_11 : f32 to vector<8x128xf32>
    %33 = arith.subf %31, %32 : vector<8x128xf32>
    %34 = arith.mulf %33, %29 : vector<8x128xf32>
    %cst_12 = arith.constant 0.199777111 : f32
    %35 = vector.broadcast %cst_12 : f32 to vector<8x128xf32>
    %36 = arith.addf %34, %35 : vector<8x128xf32>
    %37 = arith.mulf %36, %29 : vector<8x128xf32>
    %cst_13 = arith.constant 0.333329499 : f32
    %38 = vector.broadcast %cst_13 : f32 to vector<8x128xf32>
    %39 = arith.subf %37, %38 : vector<8x128xf32>
    %40 = arith.mulf %39, %29 : vector<8x128xf32>
    %41 = arith.mulf %40, %28 : vector<8x128xf32>
    %42 = arith.addf %41, %28 : vector<8x128xf32>
    %43 = arith.addf %22, %42 : vector<8x128xf32>
    %44 = tpu.bitcast %0 : vector<8x128xf32> -> vector<8x128xi32>
    %c-2147483648_i32 = arith.constant -2147483648 : i32
    %45 = vector.broadcast %c-2147483648_i32 : i32 to vector<8x128xi32>
    %46 = arith.andi %44, %45 : vector<8x128xi32>
    %47 = tpu.bitcast %43 : vector<8x128xf32> -> vector<8x128xi32>
    %48 = arith.xori %47, %46 : vector<8x128xi32>
    %49 = tpu.bitcast %48 : vector<8x128xi32> -> vector<8x128xf32>
    %c0_14 = arith.constant 0 : index
    %c0_15 = arith.constant 0 : index
    %50 = vector.load %arg2[%c0_14, %c0_15] : memref<8x128xf32, #tpu.memory_space<vmem>>, vector<8x128xf32>
    tpu.vector_store %arg2[%c0_14, %c0_15], %49 {strides = array<i32>} : memref<8x128xf32, #tpu.memory_space<vmem>>, vector<8x128xf32>,
    return
  }
  func.func @transform_0(%arg0: i32) -> (i32, i32) {
    %c0_i32 = arith.constant 0 : i32
    %c0_i32_0 = arith.constant 0 : i32
    return %arg0, %c0_i32 : i32, i32
  }
  func.func @transform_1(%arg0: i32) -> (i32, i32) {
    %c0_i32 = arith.constant 0 : i32
    %c0_i32_0 = arith.constant 0 : i32
    return %arg0, %c0_i32 : i32, i32
  }
}

</mosaic_0001>

<llo_original>
// kernel: tpu_custom_call.1
$region0: #{tpu_custom_call.1}
  #allocation0 [shape = 'u32[]', space=smem, size = 0x4, offset = 0x4, fixed_abs, tag = 'smem constant byte address 0x4 - core index']
  #allocation1 [shape = 'u32[144,128]{1,0:T(1,128)}', space=vmem, size = 0x12000, scoped, tag = 'internal scratch']
  %s0 = inlined_call_operand.hbm [shape: f32[16,128], index: 0, kind: input, shape index: {}]
  %s1 = inlined_call_operand.hbm [shape: f32[16,128], index: 1, kind: output, shape index: {}]
  %s2 = sld [smem:[#allocation0]]
  $region41: #{tpu_custom_call.1} parent=0
    _
  %s4 = ssub.s32 1, %s2
  %s5 = scalar_select 0, %s4, %s2
  $region1: #{tpu_custom_call.1} parent=0
    #allocation2 [shape = 'u8[8192]{0}', space=vmem, size = 0x2000, scoped, tag = 'input window, operand 0']
    #allocation3 [shape = 's32[2]{0}', space=sflag, size = 0x8, scoped, tag = 'scoped memory for tpu_custom_call.1']
    #allocation4 [shape = 's32[2]{0}', space=sflag, size = 0x8, scoped, tag = 'scoped memory for tpu_custom_call.1']
    #allocation5 [shape = 'u8[8192]{0}', space=vmem, size = 0x2000, scoped, tag = 'output window, operand 0']
    %6 = vsyncpa [#allocation3], 0
    %s7 = scalar_lea.sflag [#allocation3], 1
    %8 = vsyncpa %s7, 0
    %9 = vsyncpa [#allocation4], 0
    %s10 = scalar_lea.sflag [#allocation4], 1
    %11 = vsyncpa %s10, 0
    loop: start=0, step=1, limit=4
    $region2: #{tpu_custom_call.1} parent=1 // loop_pre_header
      _
    $region3: #{tpu_custom_call.1} parent=1 // loop_header
      %s13 = sphi 0, %s17
      %p14 = scmp.ge.s32.totalorder %s13, 4
      %s23 = sphi 0, %s25
      %s26 = sphi 0, %s23
      %s27 = sphi 0, %s26
      %s43 = sphi 0, %s27
      %s49 = sphi 0, %s51
      %s52 = sphi 0, %s49
      %s53 = sphi 0, %s52
      %s69 = sphi 0, %s53
    $region4: #{tpu_custom_call.1} parent=1 // loop_header_branch
      %16 = sbr.rel (%p14) target = $region8
    $region5: #{tpu_custom_call.1} parent=1 // loop_body
      %s18 = ssub.s32 %s13, 1
      %s19 = ssub.s32 %s13, 2
      %s20 = sadd.s32 %s13, 1
      %s21 = ssub.s32 %s13, %s20
      %p22 = scmp.eq.s32.totalorder %s21, 0
      %s24 = sadd.s32 %s23, 1
      %s25 = scalar_select %p22, %s23, %s24
      %p28 = pneg %p22
      %p29 = scmp.eq.s32.totalorder %s13, 1
      %p30 = por %p28, %p29
      %p31 = scmp.ne.s32.totalorder %s23, %s26
      %p32 = scmp.eq.s32.totalorder %s13, 0
      %p33 = por %p31, %p32
      %p34 = scmp.ne.s32.totalorder %s23, %s26
      %p35 = scmp.eq.s32.totalorder %s18, 1
      %p36 = por %p34, %p35
      %p37 = scmp.ne.s32.totalorder %s26, %s27
      %p38 = scmp.eq.s32.totalorder %s18, 0
      %p39 = por %p37, %p38
      %p40 = scmp.ne.s32.totalorder %s26, %s27
      %p41 = scmp.eq.s32.totalorder %s19, 1
      %p42 = por %p40, %p41
      %p44 = scmp.ne.s32.totalorder %s27, %s43
      %p45 = scmp.eq.s32.totalorder %s19, 0
      %p46 = por %p44, %p45
      %s47 = ssub.s32 %s13, %s20
      %p48 = scmp.eq.s32.totalorder %s47, 0
      %s50 = sadd.s32 %s49, 1
      %s51 = scalar_select %p48, %s49, %s50
      %p54 = pneg %p48
      %p55 = scmp.eq.s32.totalorder %s13, 1
      %p56 = por %p54, %p55
      %p57 = scmp.ne.s32.totalorder %s49, %s52
      %p58 = scmp.eq.s32.totalorder %s13, 0
      %p59 = por %p57, %p58
      %p60 = scmp.ne.s32.totalorder %s49, %s52
      %p61 = scmp.eq.s32.totalorder %s18, 1
      %p62 = por %p60, %p61
      %p63 = scmp.ne.s32.totalorder %s52, %s53
      %p64 = scmp.eq.s32.totalorder %s18, 0
      %p65 = por %p63, %p64
      %p66 = scmp.ne.s32.totalorder %s52, %s53
      %p67 = scmp.eq.s32.totalorder %s19, 1
      %p68 = por %p66, %p67
      %p70 = scmp.ne.s32.totalorder %s53, %s69
      %p71 = scmp.eq.s32.totalorder %s19, 0
      %p72 = por %p70, %p71
      %p73 = scmp.le.s32.totalorder 1, %s13
      %p74 = scmp.lt.s32.totalorder %s13, 3
      %p75 = pnand %p73, %p74
      %p76 = pneg %p75
      // Predicated region
      $region9: #{tpu_custom_call.1} parent=5 // pred_check
        _
      $region10: #{tpu_custom_call.1} parent=5 // pred_check_branch
        %78 = sbr.rel (%p75) target = $region12
      $region11: #{tpu_custom_call.1} parent=5 // pred_region
        %s79 = ssub.s32 %s13, 1
      $region12: #{tpu_custom_call.1} parent=5 // pred_fallthru
        _
      %p80 = scmp.lt.s32.totalorder %s13, 2
      // Predicated region
      $region13: #{tpu_custom_call.1} parent=5 // pred_check
        %p81 = pneg %p80
      $region14: #{tpu_custom_call.1} parent=5 // pred_check_branch
        %83 = sbr.rel (%p81) target = $region16
      $region15: #{tpu_custom_call.1} parent=5 // pred_region
        // Predicated region
        $region17: #{tpu_custom_call.1} parent=15 // pred_check
          %p84 = pneg %p33
        $region18: #{tpu_custom_call.1} parent=15 // pred_check_branch
          %86 = sbr.rel (%p84) target = $region20
        $region19: #{tpu_custom_call.1} parent=15 // pred_region
          %s87 = sand.u32 %s23, 1
          %s88 = scalar_lea.sflag [#allocation3], %s87
          %s89 = sand.u32 %s23, 1
          %s90 = smul.addr %s89, 8
          %s91 = scalar_lea.vmem [#allocation2], %s90
          %s93 = ssub.s32 128, 128
          %94 = vsyncadd %s88, %s93
          %s95 = smul.addr %s13, 128
          %s96 = scalar_lea.hbm %s0, %s95
          %s98 = sshll.u32 %s91, 4
          %s99 = int_to_ptr.vmem [resolvable:$true] %s98
          %101 = dma.hbm_to_vmem [thread:$0]  %s96, 128, %s99, %s88
        $region20: #{tpu_custom_call.1} parent=15 // pred_fallthru
          _
      $region16: #{tpu_custom_call.1} parent=5 // pred_fallthru
        _
      %p102 = scmp.le.s32.totalorder 1, %s13
      %p103 = scmp.lt.s32.totalorder %s13, 3
      %p104 = pnand %p102, %p103
      %p105 = pneg %p104
      // Predicated region
      $region21: #{tpu_custom_call.1} parent=5 // pred_check
        _
      $region22: #{tpu_custom_call.1} parent=5 // pred_check_branch
        %107 = sbr.rel (%p104) target = $region24
      $region23: #{tpu_custom_call.1} parent=5 // pred_region
        %s108 = ssub.s32 %s13, 1
        %s109 = sand.u32 %s26, 1
        %s110 = scalar_lea.sflag [#allocation3], %s109
        %s111 = sand.u32 %s26, 1
        %s112 = smul.addr %s111, 8
        %s113 = scalar_lea.vmem [#allocation2], %s112
        // Predicated region
        $region25: #{tpu_custom_call.1} parent=23 // pred_check
          %p114 = pneg %p39
        $region26: #{tpu_custom_call.1} parent=23 // pred_check_branch
          %116 = sbr.rel (%p114) target = $region28
        $region27: #{tpu_custom_call.1} parent=23 // pred_region
          %117 = dma.done %s110, 128
        $region28: #{tpu_custom_call.1} parent=23 // pred_fallthru
          _
        %s118 = sand.u32 %s26, 1
        %s119 = scalar_lea.sflag [#allocation3], %s118
        %s120 = sand.u32 %s26, 1
        %s121 = smul.addr %s120, 8
        %s122 = scalar_lea.vmem [#allocation2], %s121
        %p123 = pneg %p39
        %p124 = pneg %p36
        %p125 = pneg %p65
        %p126 = pneg %p62
        %s127 = sand.u32 %s52, 1
        %s128 = scalar_lea.sflag [#allocation4], %s127
        %s129 = sand.u32 %s52, 1
        %s130 = smul.addr %s129, 8
        %s131 = scalar_lea.vmem [#allocation5], %s130
        %v132 = vld [vmem:[%s113] sm:$0xff]
        %v133 = vand.u32 2147483647, %v132
        %v134 = vmin.f32 %v133, 1e+18
        %vm135 = vcmp.gt.f32.partialorder %v134, 2.4142137
        %vm136 = vcmp.gt.f32.partialorder %v134, 0.41421357
        %v137 = vsel %vm135, 0.0, 1.0
        %v138 = vsel %vm136, 1.0, 0.0
        %v139 = vmul.f32 %v134, %v137
        %v140 = vsub.f32 %v139, %v138
        %v141 = vmul.f32 %v138, %v134
        %v142 = vadd.f32 %v141, %v137
        %v143 = vsub.f32 %v138, %v137
        %v144 = vadd.f32 %v143, 1.0
        %v145 = vmul.f32 %v144, 0.7853982
        %v146 = vrcp.pop %v142
        %v147 = vmul.f32 %v142, %v146
        %v148 = vsub.f32 2.0, %v147
        %v149 = vmul.f32 %v146, %v148
        %v150 = vmul.f32 %v140, %v149
        %v151 = vmul.f32 %v150, %v150
        %v152 = vmul.f32 %v151, 0.080537446
        %v153 = vsub.f32 %v152, 0.13877685
        %v154 = vmul.f32 %v153, %v151
        %v155 = vadd.f32 %v154, 0.19977711
        %v156 = vmul.f32 %v155, %v151
        %v157 = vsub.f32 %v156, 0.3333295
        %v158 = vmul.f32 %v157, %v151
        %v159 = vmul.f32 %v158, %v150
        %v160 = vadd.f32 %v159, %v150
        %v161 = vadd.f32 %v145, %v160
        %v163 = vand.u32 %v132, 2147483648
        %v165 = vxor.u32 %v161, %v163
        %167 = vst [vmem:[%s131] sm:$0xff] %v165
        %s168 = sand.u32 %s52, 1
        %s169 = scalar_lea.sflag [#allocation4], %s168
        %s170 = sand.u32 %s52, 1
        %s171 = smul.addr %s170, 8
        %s172 = scalar_lea.vmem [#allocation5], %s171
        // Predicated region
        $region29: #{tpu_custom_call.1} parent=23 // pred_check
          %p173 = pneg %p62
        $region30: #{tpu_custom_call.1} parent=23 // pred_check_branch
          %175 = sbr.rel (%p173) target = $region32
        $region31: #{tpu_custom_call.1} parent=23 // pred_region
          %s177 = ssub.s32 128, 128
          %178 = vsyncadd %s169, %s177
          %s179 = smul.addr %s18, 128
          %s180 = scalar_lea.hbm %s1, %s179
          %s182 = sshll.u32 %s172, 4
          %s183 = int_to_ptr.vmem [resolvable:$true] %s182
          %185 = dma.vmem_to_hbm [thread:$0]  %s183, 128, %s180, %s169
        $region32: #{tpu_custom_call.1} parent=23 // pred_fallthru
          _
      $region24: #{tpu_custom_call.1} parent=5 // pred_fallthru
        _
      %p186 = scmp.le.s32.totalorder 2, %s13
      // Predicated region
      $region33: #{tpu_custom_call.1} parent=5 // pred_check
        %p187 = pneg %p186
      $region34: #{tpu_custom_call.1} parent=5 // pred_check_branch
        %189 = sbr.rel (%p187) target = $region36
      $region35: #{tpu_custom_call.1} parent=5 // pred_region
        %s190 = ssub.s32 %s13, 2
        // Predicated region
        $region37: #{tpu_custom_call.1} parent=35 // pred_check
          %p191 = pneg %p68
        $region38: #{tpu_custom_call.1} parent=35 // pred_check_branch
          %193 = sbr.rel (%p191) target = $region40
        $region39: #{tpu_custom_call.1} parent=35 // pred_region
          %s194 = sand.u32 %s53, 1
          %s195 = scalar_lea.sflag [#allocation4], %s194
          %s196 = sand.u32 %s53, 1
          %s197 = smul.addr %s196, 8
          %s198 = scalar_lea.vmem [#allocation5], %s197
          %199 = dma.done %s195, 128
        $region40: #{tpu_custom_call.1} parent=35 // pred_fallthru
          _
      $region36: #{tpu_custom_call.1} parent=5 // pred_fallthru
        _
    $region6: #{tpu_custom_call.1} parent=1 // loop_footer
      %s17 = sadd.s32 1, %s13
    $region7: #{tpu_custom_call.1} parent=1 // loop_footer_branch
      %12 = sbr.rel target = $region3
    $region8: #{tpu_custom_call.1} parent=1 // loop_exit
      _
    %200 = vsyncpa [#allocation3], 1
    %s201 = scalar_lea.sflag [#allocation3], 1
    %202 = vsyncpa %s201, 1
    %203 = vsyncpa [#allocation4], 1
    %s204 = scalar_lea.sflag [#allocation4], 1
    %205 = vsyncpa %s204, 1

</llo_original>
